<compile_context>
chip_gen: v7x
topology: tpu7x:2x2x1
jax: 0.10.0
libtpu: 0.0.40
codegen_flags: <defaults>
</compile_context>

<pallas_src>
import jax
import jax.numpy as jnp
import numpy as np
from jax.experimental import pallas as pl
from jax.experimental.pallas import tpu as pltpu

N_ROWS, EMB_DIM = 3, 2          # EmbeddingBag(3, 2)
D_BOT_IN, D_BOT_OUT = 2, 2      # bot_l = Linear(2, 2, bias=False)
D_TOP_IN, D_TOP_OUT = 4, 1      # top_l = Linear(4, 1, bias=False)

# Packed f32 operand layout (row-major flattening of each PyTorch tensor):
DENSE_OFF = 0                               # dense_features (1, 2)   -> 2 floats
EMB_OFF   = DENSE_OFF + D_BOT_IN            # emb table      (3, 2)   -> 6 floats
BOTW_OFF  = EMB_OFF + N_ROWS * EMB_DIM      # bot_l weight   (2, 2)   -> 4 floats (d_out, d_in)
TOPW_OFF  = BOTW_OFF + D_BOT_OUT * D_BOT_IN # top_l weight   (1, 4)   -> 4 floats (d_out, d_in)
PACK_LEN  = TOPW_OFF + D_TOP_OUT * D_TOP_IN # = 16


def dlrm_kernel(idx_ref, p_ref, out_ref):
    """Whole DLRM_Net forward on one example — pure scalar SMEM arithmetic.

    idx_ref : SMEM (S,)        int32  sparse indices (single bag, offsets=[0])
    p_ref   : SMEM (PACK_LEN,) f32    [dense | emb | bot_w | top_w], row-major flats
    out_ref : SMEM (1,)        f32
    """
    S = idx_ref.shape[0]

    # --- EmbeddingBag(mode="mean") fused with All2allMock_sync (*2):
    #     y = (sum_s emb[idx_s, :]) * (2 / S)
    scale = jnp.float32(2.0 / S)
    y0 = jnp.float32(0.0)
    y1 = jnp.float32(0.0)
    for s in range(S):                        # static unroll; S is tiny and fixed
        r = idx_ref[s]
        r = jnp.minimum(jnp.maximum(r, 0), N_ROWS - 1)   # clamp: no HW bounds check on SMEM
        base = EMB_OFF + r * EMB_DIM                     # dynamic scalar offset into packed table
        y0 = y0 + p_ref[base]
        y1 = y1 + p_ref[base + 1]
    y0 = y0 * scale
    y1 = y1 * scale

    # --- bot_l: x = dense @ W_bot.T   (weight stored (d_out, d_in) — index directly, no transpose)
    d0 = p_ref[DENSE_OFF + 0]
    d1 = p_ref[DENSE_OFF + 1]
    x0 = d0 * p_ref[BOTW_OFF + 0] + d1 * p_ref[BOTW_OFF + 1]
    x1 = d0 * p_ref[BOTW_OFF + 2] + d1 * p_ref[BOTW_OFF + 3]

    # --- top_l(cat((x, y), 1)):  out = [x0, x1, y0, y1] @ W_top.T,  W_top is (1, 4)
    out_ref[0] = (x0 * p_ref[TOPW_OFF + 0] + x1 * p_ref[TOPW_OFF + 1]
                  + y0 * p_ref[TOPW_OFF + 2] + y1 * p_ref[TOPW_OFF + 3])


@jax.jit
def dlrm_forward(dense_features, sparse_features, emb_weight, bot_w, top_w):
    # Pack every float operand into one flat f32 buffer (fused by XLA under jit):
    # 2 input DMAs (int32 indices + 16-float pack) instead of 6 per-operand DMAs.
    packed = jnp.concatenate([
        dense_features.reshape(-1),
        emb_weight.reshape(-1),
        bot_w.reshape(-1),
        top_w.reshape(-1),
    ]).astype(jnp.float32)

    smem = lambda: pl.BlockSpec(memory_space=pltpu.MemorySpace.SMEM)
    S = sparse_features.shape[0]
    out = pl.pallas_call(
        dlrm_kernel,
        out_shape=jax.ShapeDtypeStruct((D_TOP_OUT,), jnp.float32),
        in_specs=[smem(), smem()],
        out_specs=smem(),
        cost_estimate=pl.CostEstimate(
            flops=4 * S + 2 + 6 + 7,                 # gather adds + scale + bot + top
            transcendentals=0,
            bytes_accessed=4 * S + 4 * PACK_LEN + 4, # ~76 B for S=2
        ),
    )(sparse_features.astype(jnp.int32), packed)
    return out.reshape(1, D_TOP_OUT)


def make_params():
    """Deterministic parameters exactly as in DLRM_Net.__init__."""
    emb_weight = jnp.ones((N_ROWS, EMB_DIM), jnp.float32)
    emb_weight = emb_weight.at[0, :].multiply(2.0)          # get_em: row 0 doubled
    bot_w = jnp.ones((D_BOT_OUT, D_BOT_IN), jnp.float32)    # get_linear(2, 2)
    top_w = jnp.ones((D_TOP_OUT, D_TOP_IN), jnp.float32)    # get_linear(4, 1)
    return emb_weight, bot_w, top_w


def dlrm_reference(dense_features, sparse_features, emb_weight, bot_w, top_w):
    """Pure-JAX reference of the PyTorch forward."""
    em_vecs = jnp.mean(emb_weight[sparse_features], axis=0, keepdims=True)  # (1, 2)
    y = em_vecs * 2.0
    x = dense_features @ bot_w.T
    z = jnp.concatenate([x, y], axis=1)
    return z @ top_w.T


if __name__ == "__main__":
    key = jax.random.PRNGKey(0)
    k_dense, k_idx = jax.random.split(key)

    # One example (the forward's cat along dim=1 with the (1, 2) bag output implies batch=1).
    dense_features = jax.random.normal(k_dense, (1, D_BOT_IN), dtype=jnp.float32)
    sparse_features = jax.random.randint(k_idx, (2,), 0, N_ROWS, dtype=jnp.int32)

    emb_weight, bot_w, top_w = make_params()

    out = dlrm_forward(dense_features, sparse_features, emb_weight, bot_w, top_w)
    out = jax.block_until_ready(out)

    ref = dlrm_reference(dense_features, sparse_features, emb_weight, bot_w, top_w)
    assert out.shape == (1, 1), out.shape
    np.testing.assert_allclose(np.asarray(out), np.asarray(ref), rtol=1e-5, atol=1e-5)

    print("KERNEL_OK")
</pallas_src>

<mosaic_0001>
module attributes {stable_mosaic.version = 11 : i64} {
  func.func @dlrm_kernel(%arg0: memref<2xi32, #tpu.memory_space<smem>>, %arg1: memref<16xf32, #tpu.memory_space<smem>>, %arg2: memref<1xf32, #tpu.memory_space<smem>>) attributes {dimension_semantics = [], scalar_prefetch = 0 : i64, scratch_operands = 0 : i64, tpu.core_type = #tpu.core_type<tc>} {
    %c0 = arith.constant 0 : index
    %0 = memref.load %arg0[%c0] : memref<2xi32, #tpu.memory_space<smem>>
    %c0_i32 = arith.constant 0 : i32
    %1 = arith.maxsi %0, %c0_i32 : i32
    %c2_i32 = arith.constant 2 : i32
    %2 = arith.minsi %1, %c2_i32 : i32
    %c2_i32_0 = arith.constant 2 : i32
    %3 = arith.muli %2, %c2_i32_0 : i32
    %c2_i32_1 = arith.constant 2 : i32
    %4 = arith.addi %c2_i32_1, %3 : i32
    %5 = arith.index_cast %4 : i32 to index
    %6 = memref.load %arg1[%5] : memref<16xf32, #tpu.memory_space<smem>>
    %cst = arith.constant 0.000000e+00 : f32
    %7 = arith.addf %cst, %6 : f32
    %c1_i32 = arith.constant 1 : i32
    %8 = arith.addi %4, %c1_i32 : i32
    %9 = arith.index_cast %8 : i32 to index
    %10 = memref.load %arg1[%9] : memref<16xf32, #tpu.memory_space<smem>>
    %cst_2 = arith.constant 0.000000e+00 : f32
    %11 = arith.addf %cst_2, %10 : f32
    %c1 = arith.constant 1 : index
    %12 = memref.load %arg0[%c1] : memref<2xi32, #tpu.memory_space<smem>>
    %c0_i32_3 = arith.constant 0 : i32
    %13 = arith.maxsi %12, %c0_i32_3 : i32
    %c2_i32_4 = arith.constant 2 : i32
    %14 = arith.minsi %13, %c2_i32_4 : i32
    %c2_i32_5 = arith.constant 2 : i32
    %15 = arith.muli %14, %c2_i32_5 : i32
    %c2_i32_6 = arith.constant 2 : i32
    %16 = arith.addi %c2_i32_6, %15 : i32
    %17 = arith.index_cast %16 : i32 to index
    %18 = memref.load %arg1[%17] : memref<16xf32, #tpu.memory_space<smem>>
    %19 = arith.addf %7, %18 : f32
    %c1_i32_7 = arith.constant 1 : i32
    %20 = arith.addi %16, %c1_i32_7 : i32
    %21 = arith.index_cast %20 : i32 to index
    %22 = memref.load %arg1[%21] : memref<16xf32, #tpu.memory_space<smem>>
    %23 = arith.addf %11, %22 : f32
    %cst_8 = arith.constant 1.000000e+00 : f32
    %24 = arith.mulf %19, %cst_8 : f32
    %cst_9 = arith.constant 1.000000e+00 : f32
    %25 = arith.mulf %23, %cst_9 : f32
    %c0_10 = arith.constant 0 : index
    %26 = memref.load %arg1[%c0_10] : memref<16xf32, #tpu.memory_space<smem>>
    %c1_11 = arith.constant 1 : index
    %27 = memref.load %arg1[%c1_11] : memref<16xf32, #tpu.memory_space<smem>>
    %c8 = arith.constant 8 : index
    %28 = memref.load %arg1[%c8] : memref<16xf32, #tpu.memory_space<smem>>
    %29 = arith.mulf %26, %28 : f32
    %c9 = arith.constant 9 : index
    %30 = memref.load %arg1[%c9] : memref<16xf32, #tpu.memory_space<smem>>
    %31 = arith.mulf %27, %30 : f32
    %32 = arith.addf %29, %31 : f32
    %c10 = arith.constant 10 : index
    %33 = memref.load %arg1[%c10] : memref<16xf32, #tpu.memory_space<smem>>
    %34 = arith.mulf %26, %33 : f32
    %c11 = arith.constant 11 : index
    %35 = memref.load %arg1[%c11] : memref<16xf32, #tpu.memory_space<smem>>
    %36 = arith.mulf %27, %35 : f32
    %37 = arith.addf %34, %36 : f32
    %c12 = arith.constant 12 : index
    %38 = memref.load %arg1[%c12] : memref<16xf32, #tpu.memory_space<smem>>
    %39 = arith.mulf %32, %38 : f32
    %c13 = arith.constant 13 : index
    %40 = memref.load %arg1[%c13] : memref<16xf32, #tpu.memory_space<smem>>
    %41 = arith.mulf %37, %40 : f32
    %42 = arith.addf %39, %41 : f32
    %c14 = arith.constant 14 : index
    %43 = memref.load %arg1[%c14] : memref<16xf32, #tpu.memory_space<smem>>
    %44 = arith.mulf %24, %43 : f32
    %45 = arith.addf %42, %44 : f32
    %c15 = arith.constant 15 : index
    %46 = memref.load %arg1[%c15] : memref<16xf32, #tpu.memory_space<smem>>
    %47 = arith.mulf %25, %46 : f32
    %48 = arith.addf %45, %47 : f32
    %c0_12 = arith.constant 0 : index
    %49 = memref.load %arg2[%c0_12] : memref<1xf32, #tpu.memory_space<smem>>
    memref.store %48, %arg2[%c0_12] : memref<1xf32, #tpu.memory_space<smem>>
    return
  }
}

</mosaic_0001>

<llo_original>
// kernel: dlrm_forward.1
$region0: #{dlrm_forward.1}
  #allocation0 [shape = 'u32[]', space=smem, size = 0x4, offset = 0x4, fixed_abs, tag = 'smem constant byte address 0x4 - core index']
  #allocation1 [shape = 'u32[144,128]{1,0:T(1,128)}', space=vmem, size = 0x12000, scoped, tag = 'internal scratch']
  %s0 = inlined_call_operand.vmem [shape: s32[2], index: 0, kind: input, shape index: {}]
  %s1 = inlined_call_operand.vmem [shape: f32[16], index: 1, kind: input, shape index: {}]
  %s2 = inlined_call_operand.hbm [shape: f32[1], index: 2, kind: output, shape index: {}]
  %s3 = sld [smem:[#allocation0]]
  $region26: #{dlrm_forward.1} parent=0
    _
  %s5 = ssub.s32 1, %s3
  %s6 = scalar_select 0, %s5, %s3
  $region1: #{dlrm_forward.1} parent=0
    #allocation2 [shape = 'u8[512]{0}', space=smem, size = 0x200, scoped, tag = 'input window, operand 0, single buffered']
    #allocation3 [shape = 's32[1]{0}', space=sflag, size = 0x4, scoped, tag = 'scoped memory for dlrm_forward.1']
    #allocation4 [shape = 's32[1]{0}', space=sflag, size = 0x4, scoped, tag = 'scoped memory for dlrm_forward.1']
    #allocation5 [shape = 'u8[512]{0}', space=smem, size = 0x200, scoped, tag = 'input window, operand 1, single buffered']
    #allocation6 [shape = 's32[1]{0}', space=sflag, size = 0x4, scoped, tag = 'scoped memory for dlrm_forward.1']
    #allocation7 [shape = 'u8[512]{0}', space=smem, size = 0x200, scoped, tag = 'output window, operand 0, single buffered']
    %7 = vsyncpa [#allocation4], 0
    %8 = vsyncpa [#allocation6], 0
    %9 = vsyncpa [#allocation3], 0
    // Predicated region
    $region2: #{dlrm_forward.1} parent=1 // pred_check
      _
    $region3: #{dlrm_forward.1} parent=1 // pred_check_branch
      %11 = sbr.rel (0) target = $region5
    $region4: #{dlrm_forward.1} parent=1 // pred_region
      %s13 = ssub.s32 16, 16
      %14 = vsyncadd [#allocation4], %s13
      %s16 = sshll.u32 %s0, 4
      %s17 = int_to_ptr.vmem [resolvable:$true] %s16
      %19 = dma.vmem_to_smem %s17, 16, [#allocation2], [#allocation4]
    $region5: #{dlrm_forward.1} parent=1 // pred_fallthru
      _
    // Predicated region
    $region6: #{dlrm_forward.1} parent=1 // pred_check
      _
    $region7: #{dlrm_forward.1} parent=1 // pred_check_branch
      %21 = sbr.rel (0) target = $region9
    $region8: #{dlrm_forward.1} parent=1 // pred_region
      %s23 = ssub.s32 16, 16
      %24 = vsyncadd [#allocation6], %s23
      %s26 = sshll.u32 %s1, 4
      %s27 = int_to_ptr.vmem [resolvable:$true] %s26
      %29 = dma.vmem_to_smem %s27, 16, [#allocation5], [#allocation6]
    $region9: #{dlrm_forward.1} parent=1 // pred_fallthru
      _
    // Predicated region
    $region10: #{dlrm_forward.1} parent=1 // pred_check
      _
    $region11: #{dlrm_forward.1} parent=1 // pred_check_branch
      %31 = sbr.rel (0) target = $region13
    $region12: #{dlrm_forward.1} parent=1 // pred_region
      %32 = dma.done [#allocation4], 16
    $region13: #{dlrm_forward.1} parent=1 // pred_fallthru
      _
    // Predicated region
    $region14: #{dlrm_forward.1} parent=1 // pred_check
      _
    $region15: #{dlrm_forward.1} parent=1 // pred_check_branch
      %34 = sbr.rel (0) target = $region17
    $region16: #{dlrm_forward.1} parent=1 // pred_region
      %35 = dma.done [#allocation6], 16
    $region17: #{dlrm_forward.1} parent=1 // pred_fallthru
      _
    %36 = sfence
    %s37 = sld [smem:[#allocation2]]
    %p38 = scmp.gt.s32.totalorder %s37, 0
    %s39 = scalar_select %p38, %s37, 0
    %p40 = scmp.lt.s32.totalorder %s39, 2
    %s41 = scalar_select %p40, %s39, 2
    %s42 = smul.u32 %s41, 2
    %s43 = sadd.s32 %s42, 2
    %s44 = sld [smem:[#allocation5 + %s43]]
    %s45 = sadd.f32 %s44, 0.0
    %s46 = sadd.s32 %s42, 3
    %s47 = sld [smem:[#allocation5 + %s46]]
    %s48 = sadd.f32 %s47, 0.0
    %s49 = sld [smem:[#allocation2 + $0x1]]
    %p50 = scmp.gt.s32.totalorder %s49, 0
    %s51 = scalar_select %p50, %s49, 0
    %p52 = scmp.lt.s32.totalorder %s51, 2
    %s53 = scalar_select %p52, %s51, 2
    %s54 = smul.u32 %s53, 2
    %s55 = sadd.s32 %s54, 2
    %s56 = sld [smem:[#allocation5 + %s55]]
    %s57 = sadd.f32 %s45, %s56
    %s58 = sadd.s32 %s54, 3
    %s59 = sld [smem:[#allocation5 + %s58]]
    %s60 = sadd.f32 %s48, %s59
    %s61 = sld [smem:[#allocation5]]
    %s62 = sld [smem:[#allocation5 + $0x1]]
    %s63 = sld [smem:[#allocation5 + $0x8]]
    %s64 = smul.f32 %s61, %s63
    %s65 = sld [smem:[#allocation5 + $0x9]]
    %s66 = smul.f32 %s62, %s65
    %s67 = sadd.f32 %s64, %s66
    %s68 = sld [smem:[#allocation5 + $0xa]]
    %s69 = smul.f32 %s61, %s68
    %s70 = sld [smem:[#allocation5 + $0xb]]
    %s71 = smul.f32 %s62, %s70
    %s72 = sadd.f32 %s69, %s71
    %s73 = sld [smem:[#allocation5 + $0xc]]
    %s74 = smul.f32 %s67, %s73
    %s75 = sld [smem:[#allocation5 + $0xd]]
    %s76 = smul.f32 %s72, %s75
    %s77 = sadd.f32 %s74, %s76
    %s78 = sld [smem:[#allocation5 + $0xe]]
    %s79 = smul.f32 %s57, %s78
    %s80 = sadd.f32 %s77, %s79
    %s81 = sld [smem:[#allocation5 + $0xf]]
    %s82 = smul.f32 %s60, %s81
    %s83 = sadd.f32 %s80, %s82
    %s84 = scalar_lea.smem [#allocation7], 0
    %85 = sst [smem:[%s84]] %s83
    // Predicated region
    $region18: #{dlrm_forward.1} parent=1 // pred_check
      _
    $region19: #{dlrm_forward.1} parent=1 // pred_check_branch
      %87 = sbr.rel (0) target = $region21
    $region20: #{dlrm_forward.1} parent=1 // pred_region
      %s89 = ssub.s32 16, 16
      %90 = vsyncadd [#allocation3], %s89
      %93 = dma.smem_to_hbm [#allocation7], 16, %s2, [#allocation3]
    $region21: #{dlrm_forward.1} parent=1 // pred_fallthru
      _
    // Predicated region
    $region22: #{dlrm_forward.1} parent=1 // pred_check
      _
    $region23: #{dlrm_forward.1} parent=1 // pred_check_branch
      %95 = sbr.rel (0) target = $region25
    $region24: #{dlrm_forward.1} parent=1 // pred_region
      %96 = dma.done [#allocation3], 16
    $region25: #{dlrm_forward.1} parent=1 // pred_fallthru
      _
    %97 = sfence
    %98 = vsyncpa [#allocation3], 1
    %99 = vsyncpa [#allocation4], 1
    %100 = vsyncpa [#allocation6], 1

</llo_original>
